<compile_context>
chip_gen: v7x
topology: tpu7x:2x2x1
jax: 0.10.0
libtpu: 0.0.40
codegen_flags: <defaults>
</compile_context>

<pallas_src>
import jax
import jax.numpy as jnp
from jax.experimental import pallas as pl
from jax.experimental.pallas import tpu as pltpu


def _dimreduce_kernel(x_ref, w_ref, b_ref, o_ref):
    # x_ref: (C_in,  HW_tile)  channels on sublanes, spatial on lanes (bf16)
    # w_ref: (C_out, C_in)     BN-folded 1x1 conv weight (bf16)
    # b_ref: (C_out, 1)        BN-folded bias (f32)
    # o_ref: (C_out, HW_tile)  lane-dense output tile
    y = jnp.dot(w_ref[...], x_ref[...], preferred_element_type=jnp.float32)
    y = y + b_ref[...]                      # per-channel bias, broadcast over lanes (f32)
    o_ref[...] = jnp.maximum(y, 0.0).astype(o_ref.dtype)


def _round_up(x, m):
    return (x + m - 1) // m * m


def before_pooling_dim_reduce(x_nchw, weight, bias, bn_gamma, bn_beta,
                              bn_mean, bn_var, eps=1e-5,
                              max_hw_tile=2048,
                              matmul_dtype=jnp.bfloat16):
    """x_nchw: (N, C_in, H, W). weight: (C_out, C_in) from the 1x1 conv."""
    n, c_in, h, w = x_nchw.shape
    c_out = weight.shape[0]
    hw = h * w

    # Fold eval-mode BatchNorm into the conv:
    #   scale = gamma / sqrt(var + eps);  W' = scale * W;  b' = scale*(bias - mean) + beta
    scale = bn_gamma / jnp.sqrt(bn_var + eps)
    w_folded = (weight * scale[:, None]).astype(matmul_dtype)               # (C_out, C_in)
    b_folded = (scale * (bias - bn_mean) + bn_beta).reshape(c_out, 1)
    b_folded = b_folded.astype(jnp.float32)                                 # (C_out, 1)

    # Lane-dense layout: keep NCHW, flatten spatial onto the last (lane) axis.
    x3d = x_nchw.reshape(n, c_in, hw).astype(matmul_dtype)                  # (N, C_in, HW)

    # Spatial tile: multiple of 128 lanes, as large as reasonable (buffers stay
    # tiny: x tile = C_in*hw_tile*2B, out tile = C_out*hw_tile*4B, well under the
    # scoped-VMEM limit on v5e/v6e/v7x even double-buffered).
    hw_tile = min(max_hw_tile, _round_up(hw, 128))
    hw_pad = _round_up(hw, hw_tile)
    if hw_pad != hw:
        x3d = jnp.pad(x3d, ((0, 0), (0, 0), (0, hw_pad - hw)))

    grid = (n, hw_pad // hw_tile)

    out3d = pl.pallas_call(
        _dimreduce_kernel,
        out_shape=jax.ShapeDtypeStruct((n, c_out, hw_pad), x_nchw.dtype),
        grid_spec=pltpu.PrefetchScalarGridSpec(
            num_scalar_prefetch=0,
            grid=grid,
            in_specs=[
                pl.BlockSpec((None, c_in, hw_tile), lambda ni, j: (ni, 0, j)),
                pl.BlockSpec((c_out, c_in), lambda ni, j: (0, 0)),
                pl.BlockSpec((c_out, 1), lambda ni, j: (0, 0)),
            ],
            out_specs=pl.BlockSpec((None, c_out, hw_tile), lambda ni, j: (ni, 0, j)),
        ),
        compiler_params=pltpu.CompilerParams(
            # Both axes independent -> v7x can shard across its 2 TensorCores.
            dimension_semantics=("parallel", "parallel"),
            # Explicit VMEM budget; comfortably above what the tiles need and
            # below every generation's physical VMEM (v7x: 64 MiB).
            vmem_limit_bytes=32 * 1024 * 1024,
        ),
    )(x3d, w_folded, b_folded)

    return out3d[:, :, :hw].reshape(n, c_out, h, w)


def init_params(key, input_dim, output_dim):
    # Conv2d(input_dim, output_dim, 1): kaiming_normal_(mode='fan_out', relu)
    # fan_out = output_dim * 1 * 1  ->  std = sqrt(2 / fan_out)
    std = (2.0 / output_dim) ** 0.5
    weight = std * jax.random.normal(key, (output_dim, input_dim), jnp.float32)
    bias = jnp.zeros((output_dim,), jnp.float32)
    # BatchNorm2d: weight=1, bias=0, running_mean=0, running_var=1
    gamma = jnp.ones((output_dim,), jnp.float32)
    beta = jnp.zeros((output_dim,), jnp.float32)
    mean = jnp.zeros((output_dim,), jnp.float32)
    var = jnp.ones((output_dim,), jnp.float32)
    return weight, bias, gamma, beta, mean, var


if __name__ == "__main__":
    key = jax.random.PRNGKey(0)
    k_x, k_w = jax.random.split(key)

    batch, input_dim, output_dim, spatial = 2, 16, 8, 16
    x = jax.random.normal(k_x, (batch, input_dim, spatial, spatial), jnp.float32)

    weight, bias, gamma, beta, mean, var = init_params(k_w, input_dim, output_dim)

    out = before_pooling_dim_reduce(x, weight, bias, gamma, beta, mean, var)
    out = jax.block_until_ready(out)
    assert out.shape == (batch, output_dim, spatial, spatial)

    eps = 1e-5
    scale = gamma / jnp.sqrt(var + eps)
    w_fold = weight * scale[:, None]
    b_fold = scale * (bias - mean) + beta

    # Reference with matched bf16 rounding of the matmul inputs (tight check).
    x_q = x.astype(jnp.bfloat16).astype(jnp.float32)
    w_q = w_fold.astype(jnp.bfloat16).astype(jnp.float32)
    ref_q = jnp.einsum("oc,nchw->nohw", w_q, x_q) + b_fold[None, :, None, None]
    ref_q = jnp.maximum(ref_q, 0.0)
    assert jnp.allclose(out, ref_q, atol=2e-3, rtol=2e-3)

    # Full-f32 module reference (loose check: bounds bf16 input-rounding error).
    ref = jnp.einsum("nchw,oc->nohw", x, weight) + bias[None, :, None, None]
    ref = ref * scale[None, :, None, None] + (beta - mean * scale)[None, :, None, None]
    ref = jnp.maximum(ref, 0.0)
    assert jnp.allclose(out, ref, atol=1e-1, rtol=1e-1)

    print("KERNEL_OK")
</pallas_src>

<mosaic_0001>
module attributes {stable_mosaic.version = 11 : i64} {
  func.func @_dimreduce_kernel(%arg0: i32, %arg1: i32, %arg2: memref<1x16x256xbf16, #tpu.memory_space<vmem>>, %arg3: memref<8x16xbf16, #tpu.memory_space<vmem>>, %arg4: memref<8x1xf32, #tpu.memory_space<vmem>>, %arg5: memref<1x8x256xf32, #tpu.memory_space<vmem>>) attributes {dimension_semantics = [#tpu.dimension_semantics<parallel>, #tpu.dimension_semantics<parallel>], iteration_bounds = array<i64: 2, 1>, scalar_prefetch = 0 : i64, scratch_operands = 0 : i64, tpu.core_type = #tpu.core_type<tc>, window_params = [{transform_indices = @transform_0, window_bounds = array<i64: 1, 16, 256>}, {pipeline_mode = #tpu.pipeline_mode<synchronous>, transform_indices = @transform_1, window_bounds = array<i64: 8, 16>}, {pipeline_mode = #tpu.pipeline_mode<synchronous>, transform_indices = @transform_2, window_bounds = array<i64: 8, 1>}, {transform_indices = @transform_3, window_bounds = array<i64: 1, 8, 256>}]} {
    %c0 = arith.constant 0 : index
    %c0_0 = arith.constant 0 : index
    %0 = vector.load %arg3[%c0, %c0_0] : memref<8x16xbf16, #tpu.memory_space<vmem>>, vector<8x16xbf16>
    %c0_1 = arith.constant 0 : index
    %c0_2 = arith.constant 0 : index
    %c0_3 = arith.constant 0 : index
    %1 = vector.load %arg2[%c0_1, %c0_2, %c0_3] : memref<1x16x256xbf16, #tpu.memory_space<vmem>>, vector<1x16x256xbf16>
    %2 = vector.shape_cast %1 : vector<1x16x256xbf16> to vector<16x256xbf16>
    %cst = arith.constant dense<0.000000e+00> : vector<8x256xf32>
    %3 = tpu.matmul %0, %2, %cst {dimension_numbers = #tpu.dot_dimension_numbers<[1], [0], [0], [1], [0, 0, 1, 1], [], []>} : vector<8x16xbf16>, vector<16x256xbf16>, vector<8x256xf32> -> vector<8x256xf32>
    %c0_4 = arith.constant 0 : index
    %c0_5 = arith.constant 0 : index
    %4 = vector.load %arg4[%c0_4, %c0_5] : memref<8x1xf32, #tpu.memory_space<vmem>>, vector<8x1xf32>
    %5 = vector.broadcast %4 : vector<8x1xf32> to vector<8x256xf32>
    %6 = arith.addf %3, %5 : vector<8x256xf32>
    %cst_6 = arith.constant 0.000000e+00 : f32
    %7 = vector.broadcast %cst_6 : f32 to vector<8x256xf32>
    %8 = arith.maximumf %6, %7 : vector<8x256xf32>
    %c0_7 = arith.constant 0 : index
    %c0_8 = arith.constant 0 : index
    %c0_9 = arith.constant 0 : index
    %9 = vector.load %arg5[%c0_7, %c0_8, %c0_9] : memref<1x8x256xf32, #tpu.memory_space<vmem>>, vector<1x8x256xf32>
    %10 = vector.shape_cast %9 : vector<1x8x256xf32> to vector<8x256xf32>
    %11 = vector.shape_cast %8 : vector<8x256xf32> to vector<1x8x256xf32>
    tpu.vector_store %arg5[%c0_7, %c0_8, %c0_9], %11 {strides = array<i32>} : memref<1x8x256xf32, #tpu.memory_space<vmem>>, vector<1x8x256xf32>,
    return
  }
  func.func @transform_0(%arg0: i32, %arg1: i32) -> (i32, i32, i32) {
    %c0_i32 = arith.constant 0 : i32
    %c0_i32_0 = arith.constant 0 : i32
    return %arg0, %c0_i32, %arg1 : i32, i32, i32
  }
  func.func @transform_1(%arg0: i32, %arg1: i32) -> (i32, i32) {
    %c0_i32 = arith.constant 0 : i32
    %c0_i32_0 = arith.constant 0 : i32
    %c0_i32_1 = arith.constant 0 : i32
    return %c0_i32, %c0_i32_0 : i32, i32
  }
  func.func @transform_2(%arg0: i32, %arg1: i32) -> (i32, i32) {
    %c0_i32 = arith.constant 0 : i32
    %c0_i32_0 = arith.constant 0 : i32
    %c0_i32_1 = arith.constant 0 : i32
    return %c0_i32, %c0_i32_0 : i32, i32
  }
  func.func @transform_3(%arg0: i32, %arg1: i32) -> (i32, i32, i32) {
    %c0_i32 = arith.constant 0 : i32
    %c0_i32_0 = arith.constant 0 : i32
    return %arg0, %c0_i32, %arg1 : i32, i32, i32
  }
}

</mosaic_0001>

<llo_original>
// kernel: tpu_custom_call.1
$region0: #{tpu_custom_call.1}
  #allocation0 [shape = 'u32[]', space=smem, size = 0x4, offset = 0x4, fixed_abs, tag = 'smem constant byte address 0x4 - core index']
  #allocation1 [shape = 'u32[144,128]{1,0:T(1,128)}', space=vmem, size = 0x12000, scoped, tag = 'internal scratch']
  %s0 = inlined_call_operand.hbm [shape: bf16[2,16,256], index: 0, kind: input, shape index: {}]
  %s1 = inlined_call_operand.vmem [shape: bf16[8,16], index: 1, kind: input, shape index: {}]
  %s2 = inlined_call_operand.vmem [shape: f32[8,1], index: 2, kind: input, shape index: {}]
  %s3 = inlined_call_operand.hbm [shape: f32[2,8,256], index: 3, kind: output, shape index: {}]
  %s4 = sld [smem:[#allocation0]]
  $region49: #{tpu_custom_call.1} parent=0
    _
  %s6 = ssub.s32 1, %s4
  %s7 = scalar_select 0, %s6, %s4
  $region1: #{tpu_custom_call.1} parent=0
    #allocation2 [shape = 'u8[16384]{0}', space=vmem, size = 0x4000, scoped, tag = 'input window, operand 0']
    #allocation3 [shape = 's32[2]{0}', space=sflag, size = 0x8, scoped, tag = 'scoped memory for tpu_custom_call.1']
    #allocation4 [shape = 's32[2]{0}', space=sflag, size = 0x8, scoped, tag = 'scoped memory for tpu_custom_call.1']
    #allocation5 [shape = 'u8[16384]{0}', space=vmem, size = 0x4000, scoped, tag = 'output window, operand 0']
    %8 = vsyncpa [#allocation3], 0
    %s9 = scalar_lea.sflag [#allocation3], 1
    %10 = vsyncpa %s9, 0
    %11 = vsyncpa [#allocation4], 0
    %s12 = scalar_lea.sflag [#allocation4], 1
    %13 = vsyncpa %s12, 0
    loop: start=0, step=1, limit=4
    $region2: #{tpu_custom_call.1} parent=1 // loop_pre_header
      _
    $region3: #{tpu_custom_call.1} parent=1 // loop_header
      %s15 = sphi 0, %s19
      %p16 = scmp.ge.s32.totalorder %s15, 4
      %s22 = sphi 0, %s34
      %s23 = sphi 0, %s30
      %s24 = sphi 0, %s22
      %s25 = sphi 0, %s23
      %s26 = sphi 0, %s24
      %s27 = sphi 0, %s25
      %s39 = sphi 0, %s41
      %s42 = sphi 0, %s39
      %s43 = sphi 0, %s42
      %s59 = sphi 0, %s43
      %s63 = sphi 0, %s63
      %s65 = sphi 0, %s63
      %s66 = sphi 0, %s65
      %s80 = sphi 0, %s66
      %s84 = sphi 0, %s84
      %s86 = sphi 0, %s84
      %s87 = sphi 0, %s86
      %s101 = sphi 0, %s87
      %s109 = sphi 0, %s111
      %s112 = sphi 0, %s109
      %s113 = sphi 0, %s112
      %s129 = sphi 0, %s113
    $region4: #{tpu_custom_call.1} parent=1 // loop_header_branch
      %18 = sbr.rel (%p16) target = $region8
    $region5: #{tpu_custom_call.1} parent=1 // loop_body
      %s20 = ssub.s32 %s15, 1
      %s21 = ssub.s32 %s15, 2
      %s28 = sadd.s32 1, %s23
      %p29 = scmp.ge.s32.totalorder %s28, 1
      %s30 = scalar_select %p29, 0, %s28
      %s31 = sadd.s32 1, %s22
      %s32 = scalar_select %p29, %s31, %s22
      %p33 = scmp.ge.s32.totalorder %s32, 2
      %s34 = scalar_select %p33, 0, %s32
      %s35 = ssub.s32 %s22, %s34
      %s36 = ssub.s32 %s23, %s30
      %s37 = sor.u32 %s35, %s36
      %p38 = scmp.eq.s32.totalorder %s37, 0
      %s40 = sadd.s32 %s39, 1
      %s41 = scalar_select %p38, %s39, %s40
      %p44 = pneg %p38
      %p45 = scmp.eq.s32.totalorder %s15, 1
      %p46 = por %p44, %p45
      %p47 = scmp.ne.s32.totalorder %s39, %s42
      %p48 = scmp.eq.s32.totalorder %s15, 0
      %p49 = por %p47, %p48
      %p50 = scmp.ne.s32.totalorder %s39, %s42
      %p51 = scmp.eq.s32.totalorder %s20, 1
      %p52 = por %p50, %p51
      %p53 = scmp.ne.s32.totalorder %s42, %s43
      %p54 = scmp.eq.s32.totalorder %s20, 0
      %p55 = por %p53, %p54
      %p56 = scmp.ne.s32.totalorder %s42, %s43
      %p57 = scmp.eq.s32.totalorder %s21, 1
      %p58 = por %p56, %p57
      %p60 = scmp.ne.s32.totalorder %s43, %s59
      %p61 = scmp.eq.s32.totalorder %s21, 0
      %p62 = por %p60, %p61
      %s64 = sadd.s32 %s63, 1
      %p67 = scmp.eq.s32.totalorder %s15, 1
      %p68 = scmp.ne.s32.totalorder %s63, %s65
      %p69 = scmp.eq.s32.totalorder %s15, 0
      %p70 = por %p68, %p69
      %p71 = scmp.ne.s32.totalorder %s63, %s65
      %p72 = scmp.eq.s32.totalorder %s20, 1
      %p73 = por %p71, %p72
      %p74 = scmp.ne.s32.totalorder %s65, %s66
      %p75 = scmp.eq.s32.totalorder %s20, 0
      %p76 = por %p74, %p75
      %p77 = scmp.ne.s32.totalorder %s65, %s66
      %p78 = scmp.eq.s32.totalorder %s21, 1
      %p79 = por %p77, %p78
      %p81 = scmp.ne.s32.totalorder %s66, %s80
      %p82 = scmp.eq.s32.totalorder %s21, 0
      %p83 = por %p81, %p82
      %s85 = sadd.s32 %s84, 1
      %p88 = scmp.eq.s32.totalorder %s15, 1
      %p89 = scmp.ne.s32.totalorder %s84, %s86
      %p90 = scmp.eq.s32.totalorder %s15, 0
      %p91 = por %p89, %p90
      %p92 = scmp.ne.s32.totalorder %s84, %s86
      %p93 = scmp.eq.s32.totalorder %s20, 1
      %p94 = por %p92, %p93
      %p95 = scmp.ne.s32.totalorder %s86, %s87
      %p96 = scmp.eq.s32.totalorder %s20, 0
      %p97 = por %p95, %p96
      %p98 = scmp.ne.s32.totalorder %s86, %s87
      %p99 = scmp.eq.s32.totalorder %s21, 1
      %p100 = por %p98, %p99
      %p102 = scmp.ne.s32.totalorder %s87, %s101
      %p103 = scmp.eq.s32.totalorder %s21, 0
      %p104 = por %p102, %p103
      %s105 = ssub.s32 %s22, %s34
      %s106 = ssub.s32 %s23, %s30
      %s107 = sor.u32 %s105, %s106
      %p108 = scmp.eq.s32.totalorder %s107, 0
      %s110 = sadd.s32 %s109, 1
      %s111 = scalar_select %p108, %s109, %s110
      %p114 = pneg %p108
      %p115 = scmp.eq.s32.totalorder %s15, 1
      %p116 = por %p114, %p115
      %p117 = scmp.ne.s32.totalorder %s109, %s112
      %p118 = scmp.eq.s32.totalorder %s15, 0
      %p119 = por %p117, %p118
      %p120 = scmp.ne.s32.totalorder %s109, %s112
      %p121 = scmp.eq.s32.totalorder %s20, 1
      %p122 = por %p120, %p121
      %p123 = scmp.ne.s32.totalorder %s112, %s113
      %p124 = scmp.eq.s32.totalorder %s20, 0
      %p125 = por %p123, %p124
      %p126 = scmp.ne.s32.totalorder %s112, %s113
      %p127 = scmp.eq.s32.totalorder %s21, 1
      %p128 = por %p126, %p127
      %p130 = scmp.ne.s32.totalorder %s113, %s129
      %p131 = scmp.eq.s32.totalorder %s21, 0
      %p132 = por %p130, %p131
      %p133 = scmp.le.s32.totalorder 1, %s15
      %p134 = scmp.lt.s32.totalorder %s15, 3
      %p135 = pnand %p133, %p134
      %p136 = pneg %p135
      // Predicated region
      $region9: #{tpu_custom_call.1} parent=5 // pred_check
        _
      $region10: #{tpu_custom_call.1} parent=5 // pred_check_branch
        %138 = sbr.rel (%p135) target = $region12
      $region11: #{tpu_custom_call.1} parent=5 // pred_region
        %s139 = ssub.s32 %s15, 1
        // Predicated region
        $region13: #{tpu_custom_call.1} parent=11 // pred_check
          %p140 = pneg %p76
        $region14: #{tpu_custom_call.1} parent=11 // pred_check_branch
          %142 = sbr.rel (%p140) target = $region16
        $region15: #{tpu_custom_call.1} parent=11 // pred_region
          _
        $region16: #{tpu_custom_call.1} parent=11 // pred_fallthru
          _
        // Predicated region
        $region17: #{tpu_custom_call.1} parent=11 // pred_check
          %p143 = pneg %p97
        $region18: #{tpu_custom_call.1} parent=11 // pred_check_branch
          %145 = sbr.rel (%p143) target = $region20
        $region19: #{tpu_custom_call.1} parent=11 // pred_region
          _
        $region20: #{tpu_custom_call.1} parent=11 // pred_fallthru
          _
      $region12: #{tpu_custom_call.1} parent=5 // pred_fallthru
        _
      %p146 = scmp.lt.s32.totalorder %s15, 2
      // Predicated region
      $region21: #{tpu_custom_call.1} parent=5 // pred_check
        %p147 = pneg %p146
      $region22: #{tpu_custom_call.1} parent=5 // pred_check_branch
        %149 = sbr.rel (%p147) target = $region24
      $region23: #{tpu_custom_call.1} parent=5 // pred_region
        // Predicated region
        $region25: #{tpu_custom_call.1} parent=23 // pred_check
          %p150 = pneg %p49
        $region26: #{tpu_custom_call.1} parent=23 // pred_check_branch
          %152 = sbr.rel (%p150) target = $region28
        $region27: #{tpu_custom_call.1} parent=23 // pred_region
          %s153 = sand.u32 %s39, 1
          %s154 = scalar_lea.sflag [#allocation3], %s153
          %s155 = sand.u32 %s39, 1
          %s156 = smul.addr %s155, 16
          %s157 = scalar_lea.vmem [#allocation2], %s156
          %s158 = smul.u32 2, %s23
          %s160 = ssub.s32 256, 256
          %161 = vsyncadd %s154, %s160
          %s162 = smul.addr %s22, 4
          %s163 = sadd.s32 %s158, %s162
          %s164 = smul.addr %s163, 64
          %s165 = scalar_lea.hbm %s0, %s164
          %s166 = sshll.u32 %s157, 4
          %s167 = int_to_ptr.vmem [resolvable:$true] %s166
          %172 = dma.hbm_to_vmem [thread:$0]  %s165, 256, %s167, %s154, 128, 128, 8
        $region28: #{tpu_custom_call.1} parent=23 // pred_fallthru
          _
      $region24: #{tpu_custom_call.1} parent=5 // pred_fallthru
        _
      %p173 = scmp.le.s32.totalorder 1, %s15
      %p174 = scmp.lt.s32.totalorder %s15, 3
      %p175 = pnand %p173, %p174
      %p176 = pneg %p175
      // Predicated region
      $region29: #{tpu_custom_call.1} parent=5 // pred_check
        _
      $region30: #{tpu_custom_call.1} parent=5 // pred_check_branch
        %178 = sbr.rel (%p175) target = $region32
      $region31: #{tpu_custom_call.1} parent=5 // pred_region
        %s179 = ssub.s32 %s15, 1
        %s180 = sand.u32 %s42, 1
        %s181 = scalar_lea.sflag [#allocation3], %s180
        %s182 = sand.u32 %s42, 1
        %s183 = smul.addr %s182, 16
        %s184 = scalar_lea.vmem [#allocation2], %s183
        // Predicated region
        $region33: #{tpu_custom_call.1} parent=31 // pred_check
          %p185 = pneg %p55
        $region34: #{tpu_custom_call.1} parent=31 // pred_check_branch
          %187 = sbr.rel (%p185) target = $region36
        $region35: #{tpu_custom_call.1} parent=31 // pred_region
          %188 = dma.done %s181, 256
        $region36: #{tpu_custom_call.1} parent=31 // pred_fallthru
          _
        %s189 = sand.u32 %s42, 1
        %s190 = scalar_lea.sflag [#allocation3], %s189
        %s191 = sand.u32 %s42, 1
        %s192 = smul.addr %s191, 16
        %s193 = scalar_lea.vmem [#allocation2], %s192
        %p194 = pneg %p55
        %p195 = pneg %p52
        %p196 = pneg %p76
        %p197 = pneg %p73
        %p198 = pneg %p97
        %p199 = pneg %p94
        %p200 = pneg %p125
        %p201 = pneg %p122
        %s202 = sand.u32 %s112, 1
        %s203 = scalar_lea.sflag [#allocation4], %s202
        %s204 = sand.u32 %s112, 1
        %s205 = smul.addr %s204, 16
        %s206 = scalar_lea.vmem [#allocation5], %s205
        %s207 = smul.u32 2, %s25
        %s208 = smul.u32 2, %s25
        %v210 = vld [vmem:[%s1] sm:$0xf]
        %v211 = vld [vmem:[%s184] sm:$0xff]
        %v212 = vld [vmem:[%s184 + $0x8] sm:$0xff]
        %v213 = vld [vmem:[%s2] sm:$0xff]
        %215 = vset.pattern.permute.xlu0 0
        %216 = vperm.xlu0 %215, %v213
        %v217 = vpop.permute.xlu0 %216
        %v221 = vunpack.c.l.b16 %v211
        %v222 = vunpack.c.h.b16 %v211
        %v223 = vunpack.c.l.b16 %v212
        %v224 = vunpack.c.h.b16 %v212
        %v225 = vpack.c.b16 %v223, %v221
        %v226 = vpack.c.b16 %v224, %v222
        %vm229 = vcmask 130048
        %v231 = vsel %vm229, %v210, 0
        %233 = vmatprep.subr.bf16.mxu0 %v226
        %234 = vmatpush1.bf16.msra.mxu0 %v225
        %235 = vmatprep.subr.bf16.mxu0 0
        %236 = vmatpush1.bf16.msra.mxu0 0
        %237 = vmatprep.subr.bf16.mxu0 0
        %238 = vmatpush1.bf16.msra.mxu0 0
        %239 = vmatprep.subr.bf16.mxu0 0
        %240 = vmatpush1.bf16.msra.mxu0 0
        %241 = vmatprep.subr.bf16.mxu0 0
        %242 = vmatpush1.bf16.msra.mxu0 0
        %243 = vmatprep.subr.bf16.mxu0 0
        %244 = vmatpush1.bf16.msra.mxu0 0
        %245 = vmatprep.subr.bf16.mxu0 0
        %246 = vmatpush1.bf16.msra.mxu0 0
        %247 = vmatprep.subr.bf16.mxu0 0
        %248 = vmatpush1.bf16.msra.mxu0 0
        %249 = vmatprep.subr.bf16.mxu0 0
        %250 = vmatpush1.bf16.msra.mxu0 0
        %251 = vmatprep.subr.bf16.mxu0 0
        %252 = vmatpush1.bf16.msra.mxu0 0
        %253 = vmatprep.subr.bf16.mxu0 0
        %254 = vmatpush1.bf16.msra.mxu0 0
        %255 = vmatprep.subr.bf16.mxu0 0
        %256 = vmatpush1.bf16.msra.mxu0 0
        %257 = vmatprep.subr.bf16.mxu0 0
        %258 = vmatpush1.bf16.msra.mxu0 0
        %259 = vmatprep.subr.bf16.mxu0 0
        %260 = vmatpush1.bf16.msra.mxu0 0
        %261 = vmatprep.subr.bf16.mxu0 0
        %262 = vmatpush1.bf16.msra.mxu0 0
        %263 = vmatprep.subr.bf16.mxu0 0
        %264 = vmatpush1.bf16.msra.mxu0 0
        %265 = vmatprep.mubr.bf16.mxu0 0
        %266 = vmatmul.mubr.bf16.gmra.mrb[0].mxu0 %v231
        %v267 = vpop.f32.mrb[0].mxu0
        %v268 = vadd.f32 %v217, %v267
        %v269 = vpop.f32.mrb[0].mxu0
        %v270 = vadd.f32 %v217, %v269
        %v271 = vpop.f32.mrb[0].mxu0
        %v272 = vpop.f32.mrb[0].mxu0
        %273 = vdwg.mxu0
        %v274 = vmax.f32 %v268, 0.0
        %v275 = vmax.f32 %v270, 0.0
        %276 = vst [vmem:[%s206] sm:$0xff] %v274
        %277 = vst [vmem:[%s206 + $0x8] sm:$0xff] %v275
        %s278 = sand.u32 %s112, 1
        %s279 = scalar_lea.sflag [#allocation4], %s278
        %s280 = sand.u32 %s112, 1
        %s281 = smul.addr %s280, 16
        %s282 = scalar_lea.vmem [#allocation5], %s281
        // Predicated region
        $region37: #{tpu_custom_call.1} parent=31 // pred_check
          %p283 = pneg %p122
        $region38: #{tpu_custom_call.1} parent=31 // pred_check_branch
          %285 = sbr.rel (%p283) target = $region40
        $region39: #{tpu_custom_call.1} parent=31 // pred_region
          %s286 = smul.u32 2, %s25
          %s288 = ssub.s32 256, 256
          %289 = vsyncadd %s279, %s288
          %s290 = smul.addr %s24, 2
          %s291 = sadd.s32 %s286, %s290
          %s292 = smul.addr %s291, 128
          %s293 = scalar_lea.hbm %s3, %s292
          %s295 = sshll.u32 %s282, 4
          %s296 = int_to_ptr.vmem [resolvable:$true] %s295
          %298 = dma.vmem_to_hbm [thread:$0]  %s296, 256, %s293, %s279
        $region40: #{tpu_custom_call.1} parent=31 // pred_fallthru
          _
      $region32: #{tpu_custom_call.1} parent=5 // pred_fallthru
        _
      %p299 = scmp.le.s32.totalorder 2, %s15
      // Predicated region
      $region41: #{tpu_custom_call.1} parent=5 // pred_check
        %p300 = pneg %p299
      $region42: #{tpu_custom_call.1} parent=5 // pred_check_branch
        %302 = sbr.rel (%p300) target = $region44
      $region43: #{tpu_custom_call.1} parent=5 // pred_region
        %s303 = ssub.s32 %s15, 2
        // Predicated region
        $region45: #{tpu_custom_call.1} parent=43 // pred_check
          %p304 = pneg %p128
        $region46: #{tpu_custom_call.1} parent=43 // pred_check_branch
          %306 = sbr.rel (%p304) target = $region48
        $region47: #{tpu_custom_call.1} parent=43 // pred_region
          %s307 = sand.u32 %s113, 1
          %s308 = scalar_lea.sflag [#allocation4], %s307
          %s309 = sand.u32 %s113, 1
          %s310 = smul.addr %s309, 16
          %s311 = scalar_lea.vmem [#allocation5], %s310
          %312 = dma.done %s308, 256
        $region48: #{tpu_custom_call.1} parent=43 // pred_fallthru
          _
      $region44: #{tpu_custom_call.1} parent=5 // pred_fallthru
        _
    $region6: #{tpu_custom_call.1} parent=1 // loop_footer
      %s19 = sadd.s32 1, %s15
    $region7: #{tpu_custom_call.1} parent=1 // loop_footer_branch
      %14 = sbr.rel target = $region3
    $region8: #{tpu_custom_call.1} parent=1 // loop_exit
      _
    %313 = vsyncpa [#allocation3], 1
    %s314 = scalar_lea.sflag [#allocation3], 1
    %315 = vsyncpa %s314, 1
    %316 = vsyncpa [#allocation4], 1
    %s317 = scalar_lea.sflag [#allocation4], 1
    %318 = vsyncpa %s317, 1

</llo_original>
